<compile_context>
chip_gen: v7x
topology: tpu7x:2x2x1
jax: 0.10.0
libtpu: 0.0.40
codegen_flags: <defaults>
</compile_context>

<pallas_src>
import jax
import jax.numpy as jnp
from jax.experimental import pallas as pl
from jax.experimental.pallas import tpu as pltpu


# ---------------------------------------------------------------------------
# Pallas kernel: per-channel scale of a lane-dense (channels, spatial) slab
# ---------------------------------------------------------------------------
def _mask_kernel(x_ref, s_ref, o_ref):
  # x_ref: (tc, tl)   s_ref: (tc, 1)   o_ref: (tc, tl)
  o_ref[...] = x_ref[...] * s_ref[...]


def _pick_tiles(C, L, itemsize):
  """Choose (tc, tl) so blocks are aligned (or full-extent) and ~<=2 MiB."""
  budget_elems = (2 << 20) // itemsize            # ~2 MiB per block buffer
  # Lane (spatial) tile: multiple of 128 when possible, else full extent.
  if L % 128 == 0:
    tl = min(L, 2048)
  else:
    tl = L                                        # full-extent lane block
  # Sublane (channel) tile: multiple of 8 when possible, else full extent.
  if C % 8 == 0:
    tc = max(8, min(C, (budget_elems // max(tl, 1)) // 8 * 8))
  else:
    # TODO(synk): C not a multiple of 8 with a huge spatial dim could exceed
    # the block budget; fine for realistic conv shapes (e.g. C=3 stem).
    tc = C
  return tc, tl


def mask_apply(x_nchw, weight):
  """out = x * weight[None, :, None, None]   (x: NCHW, weight: (C,))."""
  N, C, H, W = x_nchw.shape
  L = H * W

  xm = x_nchw.reshape(N, C, L)                    # contiguous view, no copy
  scale = weight.astype(x_nchw.dtype).reshape(C, 1)

  tc, tl = _pick_tiles(C, L, jnp.dtype(x_nchw.dtype).itemsize)
  grid = (N, pl.cdiv(C, tc), pl.cdiv(L, tl))

  out = pl.pallas_call(
      _mask_kernel,
      out_shape=jax.ShapeDtypeStruct((N, C, L), x_nchw.dtype),
      grid=grid,
      in_specs=[
          pl.BlockSpec((None, tc, tl), lambda n, ci, li: (n, ci, li)),
          pl.BlockSpec((tc, 1), lambda n, ci, li: (ci, 0)),
      ],
      out_specs=pl.BlockSpec((None, tc, tl), lambda n, ci, li: (n, ci, li)),
      compiler_params=pltpu.CompilerParams(
          dimension_semantics=("parallel", "parallel", "parallel")),
  )(xm, scale)
  return out.reshape(N, C, H, W)


# ---------------------------------------------------------------------------
# KSE indicator / threshold (pure JAX sort/scalar work; not a Pallas hot path)
# ---------------------------------------------------------------------------
def kse(weight_kse):
  cout, cin = weight_kse.shape[0], weight_kse.shape[1]
  w = jnp.transpose(weight_kse, (1, 0, 2, 3)).reshape(cin, cout, -1)
  ks = jnp.sum(jnp.sum(jnp.abs(w), axis=2), axis=1)          # sum_cout ||.||_1
  ks = (ks - ks.min()) / (ks.max() - ks.min())
  indicator = jnp.sqrt(ks / (1.0 + 0.0))                     # ke_weight = 0
  indicator = (indicator - indicator.min()) / (indicator.max() - indicator.min())
  order = jnp.argsort(indicator)
  thre = indicator[order[int(cin * 0.5)]]                    # temp = 0.5
  return indicator, thre


def mask_update_weight(weight, weight_kse, planes, iteration):
  # TODO(synk): the reference reads `iteration` / `epoch` from a global `gl`
  # store and mutates Parameter.data in place; here iteration is an explicit
  # argument and the update is returned functionally.
  if planes is None or iteration != 1:
    return weight
  indicator, thre = kse(weight_kse)
  return jnp.where((indicator > thre) & (weight < 0.5),
                   jnp.asarray(0.75, weight.dtype), weight)


def mask_forward(x_nchw, weight, weight_kse, planes=None, iteration=0):
  """Functional equivalent of Mask.forward; also returns the (possibly
  KSE-updated) weight since the reference mutates the Parameter in place."""
  weight = mask_update_weight(weight, weight_kse, planes, iteration)
  return mask_apply(x_nchw, weight), weight


if __name__ == "__main__":
  N, C, H, W = 2, 4, 16, 16
  k_x, k_kse = jax.random.split(jax.random.PRNGKey(0))
  x = jax.random.normal(k_x, (N, C, H, W), jnp.float32)
  # Mask(init_value=[...], planes=C): per-channel learnable scalars (some < 0.5
  # so the iteration==1 KSE update path is exercised).
  weight = jnp.array([0.25, 1.0, 0.4, 0.9], jnp.float32)
  # weight_kse: a conv weight (Cout, Cin=C, kh, kw) driving the KSE indicator.
  weight_kse = jax.random.normal(k_kse, (8, C, 3, 3), jnp.float32)

  out, w_eff = mask_forward(x, weight, weight_kse, planes=C, iteration=1)
  out = jax.block_until_ready(out)

  ref = x * w_eff[None, :, None, None]
  assert out.shape == (N, C, H, W)
  assert bool(jnp.all(jnp.isfinite(out)))
  assert bool(jnp.allclose(out, ref, atol=1e-6, rtol=1e-6))
  print("KERNEL_OK")
</pallas_src>

<mosaic_0001>
module attributes {stable_mosaic.version = 11 : i64} {
  func.func @_mask_kernel(%arg0: i32, %arg1: i32, %arg2: i32, %arg3: memref<1x4x256xf32, #tpu.memory_space<vmem>>, %arg4: memref<4x1xf32, #tpu.memory_space<vmem>>, %arg5: memref<1x4x256xf32, #tpu.memory_space<vmem>>) attributes {dimension_semantics = [#tpu.dimension_semantics<parallel>, #tpu.dimension_semantics<parallel>, #tpu.dimension_semantics<parallel>], iteration_bounds = array<i64: 2, 1, 1>, scalar_prefetch = 0 : i64, scratch_operands = 0 : i64, tpu.core_type = #tpu.core_type<tc>, window_params = [{transform_indices = @transform_0, window_bounds = array<i64: 1, 4, 256>}, {transform_indices = @transform_1, window_bounds = array<i64: 4, 1>}, {transform_indices = @transform_2, window_bounds = array<i64: 1, 4, 256>}]} {
    %c0 = arith.constant 0 : index
    %c0_0 = arith.constant 0 : index
    %c0_1 = arith.constant 0 : index
    %0 = vector.load %arg3[%c0, %c0_0, %c0_1] : memref<1x4x256xf32, #tpu.memory_space<vmem>>, vector<1x4x256xf32>
    %1 = vector.shape_cast %0 : vector<1x4x256xf32> to vector<4x256xf32>
    %c0_2 = arith.constant 0 : index
    %c0_3 = arith.constant 0 : index
    %2 = vector.load %arg4[%c0_2, %c0_3] : memref<4x1xf32, #tpu.memory_space<vmem>>, vector<4x1xf32>
    %3 = vector.broadcast %2 : vector<4x1xf32> to vector<4x256xf32>
    %4 = arith.mulf %1, %3 : vector<4x256xf32>
    %c0_4 = arith.constant 0 : index
    %c0_5 = arith.constant 0 : index
    %c0_6 = arith.constant 0 : index
    %5 = vector.load %arg5[%c0_4, %c0_5, %c0_6] : memref<1x4x256xf32, #tpu.memory_space<vmem>>, vector<1x4x256xf32>
    %6 = vector.shape_cast %5 : vector<1x4x256xf32> to vector<4x256xf32>
    %7 = vector.shape_cast %4 : vector<4x256xf32> to vector<1x4x256xf32>
    tpu.vector_store %arg5[%c0_4, %c0_5, %c0_6], %7 {strides = array<i32>} : memref<1x4x256xf32, #tpu.memory_space<vmem>>, vector<1x4x256xf32>,
    return
  }
  func.func @transform_0(%arg0: i32, %arg1: i32, %arg2: i32) -> (i32, i32, i32) {
    %c0_i32 = arith.constant 0 : i32
    return %arg0, %arg1, %arg2 : i32, i32, i32
  }
  func.func @transform_1(%arg0: i32, %arg1: i32, %arg2: i32) -> (i32, i32) {
    %c0_i32 = arith.constant 0 : i32
    %c0_i32_0 = arith.constant 0 : i32
    return %arg1, %c0_i32 : i32, i32
  }
  func.func @transform_2(%arg0: i32, %arg1: i32, %arg2: i32) -> (i32, i32, i32) {
    %c0_i32 = arith.constant 0 : i32
    return %arg0, %arg1, %arg2 : i32, i32, i32
  }
}

</mosaic_0001>

<llo_original>
// kernel: tpu_custom_call.1
$region0: #{tpu_custom_call.1}
  #allocation0 [shape = 'u32[]', space=smem, size = 0x4, offset = 0x4, fixed_abs, tag = 'smem constant byte address 0x4 - core index']
  #allocation1 [shape = 'u32[144,128]{1,0:T(1,128)}', space=vmem, size = 0x12000, scoped, tag = 'internal scratch']
  %s0 = inlined_call_operand.hbm [shape: f32[2,4,256], index: 0, kind: input, shape index: {}]
  %s1 = inlined_call_operand.vmem [shape: f32[4,1], index: 1, kind: input, shape index: {}]
  %s2 = inlined_call_operand.hbm [shape: f32[2,4,256], index: 2, kind: output, shape index: {}]
  %s3 = sld [smem:[#allocation0]]
  $region45: #{tpu_custom_call.1} parent=0
    _
  %s5 = ssub.s32 1, %s3
  %s6 = scalar_select 0, %s5, %s3
  $region1: #{tpu_custom_call.1} parent=0
    #allocation2 [shape = 'u8[8192]{0}', space=vmem, size = 0x2000, scoped, tag = 'input window, operand 0']
    #allocation3 [shape = 's32[2]{0}', space=sflag, size = 0x8, scoped, tag = 'scoped memory for tpu_custom_call.1']
    #allocation4 [shape = 's32[2]{0}', space=sflag, size = 0x8, scoped, tag = 'scoped memory for tpu_custom_call.1']
    #allocation5 [shape = 'u8[8192]{0}', space=vmem, size = 0x2000, scoped, tag = 'output window, operand 0']
    %7 = vsyncpa [#allocation3], 0
    %s8 = scalar_lea.sflag [#allocation3], 1
    %9 = vsyncpa %s8, 0
    %10 = vsyncpa [#allocation4], 0
    %s11 = scalar_lea.sflag [#allocation4], 1
    %12 = vsyncpa %s11, 0
    loop: start=0, step=1, limit=4
    $region2: #{tpu_custom_call.1} parent=1 // loop_pre_header
      _
    $region3: #{tpu_custom_call.1} parent=1 // loop_header
      %s14 = sphi 0, %s18
      %p15 = scmp.ge.s32.totalorder %s14, 4
      %s21 = sphi 0, %s40
      %s22 = sphi 0, %s36
      %s23 = sphi 0, %s32
      %s24 = sphi 0, %s21
      %s25 = sphi 0, %s22
      %s26 = sphi 0, %s23
      %s27 = sphi 0, %s24
      %s28 = sphi 0, %s25
      %s29 = sphi 0, %s26
      %s47 = sphi 0, %s49
      %s50 = sphi 0, %s47
      %s51 = sphi 0, %s50
      %s67 = sphi 0, %s51
      %s73 = sphi 0, %s75
      %s76 = sphi 0, %s73
      %s77 = sphi 0, %s76
      %s93 = sphi 0, %s77
      %s103 = sphi 0, %s105
      %s106 = sphi 0, %s103
      %s107 = sphi 0, %s106
      %s123 = sphi 0, %s107
    $region4: #{tpu_custom_call.1} parent=1 // loop_header_branch
      %17 = sbr.rel (%p15) target = $region8
    $region5: #{tpu_custom_call.1} parent=1 // loop_body
      %s19 = ssub.s32 %s14, 1
      %s20 = ssub.s32 %s14, 2
      %s30 = sadd.s32 1, %s23
      %p31 = scmp.ge.s32.totalorder %s30, 1
      %s32 = scalar_select %p31, 0, %s30
      %s33 = sadd.s32 1, %s22
      %s34 = scalar_select %p31, %s33, %s22
      %p35 = scmp.ge.s32.totalorder %s34, 1
      %s36 = scalar_select %p35, 0, %s34
      %s37 = sadd.s32 1, %s21
      %s38 = scalar_select %p35, %s37, %s21
      %p39 = scmp.ge.s32.totalorder %s38, 2
      %s40 = scalar_select %p39, 0, %s38
      %s41 = ssub.s32 %s21, %s40
      %s42 = ssub.s32 %s22, %s36
      %s43 = sor.u32 %s41, %s42
      %s44 = ssub.s32 %s23, %s32
      %s45 = sor.u32 %s43, %s44
      %p46 = scmp.eq.s32.totalorder %s45, 0
      %s48 = sadd.s32 %s47, 1
      %s49 = scalar_select %p46, %s47, %s48
      %p52 = pneg %p46
      %p53 = scmp.eq.s32.totalorder %s14, 1
      %p54 = por %p52, %p53
      %p55 = scmp.ne.s32.totalorder %s47, %s50
      %p56 = scmp.eq.s32.totalorder %s14, 0
      %p57 = por %p55, %p56
      %p58 = scmp.ne.s32.totalorder %s47, %s50
      %p59 = scmp.eq.s32.totalorder %s19, 1
      %p60 = por %p58, %p59
      %p61 = scmp.ne.s32.totalorder %s50, %s51
      %p62 = scmp.eq.s32.totalorder %s19, 0
      %p63 = por %p61, %p62
      %p64 = scmp.ne.s32.totalorder %s50, %s51
      %p65 = scmp.eq.s32.totalorder %s20, 1
      %p66 = por %p64, %p65
      %p68 = scmp.ne.s32.totalorder %s51, %s67
      %p69 = scmp.eq.s32.totalorder %s20, 0
      %p70 = por %p68, %p69
      %s71 = ssub.s32 %s22, %s36
      %p72 = scmp.eq.s32.totalorder %s71, 0
      %s74 = sadd.s32 %s73, 1
      %s75 = scalar_select %p72, %s73, %s74
      %p78 = pneg %p72
      %p79 = scmp.eq.s32.totalorder %s14, 1
      %p80 = por %p78, %p79
      %p81 = scmp.ne.s32.totalorder %s73, %s76
      %p82 = scmp.eq.s32.totalorder %s14, 0
      %p83 = por %p81, %p82
      %p84 = scmp.ne.s32.totalorder %s73, %s76
      %p85 = scmp.eq.s32.totalorder %s19, 1
      %p86 = por %p84, %p85
      %p87 = scmp.ne.s32.totalorder %s76, %s77
      %p88 = scmp.eq.s32.totalorder %s19, 0
      %p89 = por %p87, %p88
      %p90 = scmp.ne.s32.totalorder %s76, %s77
      %p91 = scmp.eq.s32.totalorder %s20, 1
      %p92 = por %p90, %p91
      %p94 = scmp.ne.s32.totalorder %s77, %s93
      %p95 = scmp.eq.s32.totalorder %s20, 0
      %p96 = por %p94, %p95
      %s97 = ssub.s32 %s21, %s40
      %s98 = ssub.s32 %s22, %s36
      %s99 = sor.u32 %s97, %s98
      %s100 = ssub.s32 %s23, %s32
      %s101 = sor.u32 %s99, %s100
      %p102 = scmp.eq.s32.totalorder %s101, 0
      %s104 = sadd.s32 %s103, 1
      %s105 = scalar_select %p102, %s103, %s104
      %p108 = pneg %p102
      %p109 = scmp.eq.s32.totalorder %s14, 1
      %p110 = por %p108, %p109
      %p111 = scmp.ne.s32.totalorder %s103, %s106
      %p112 = scmp.eq.s32.totalorder %s14, 0
      %p113 = por %p111, %p112
      %p114 = scmp.ne.s32.totalorder %s103, %s106
      %p115 = scmp.eq.s32.totalorder %s19, 1
      %p116 = por %p114, %p115
      %p117 = scmp.ne.s32.totalorder %s106, %s107
      %p118 = scmp.eq.s32.totalorder %s19, 0
      %p119 = por %p117, %p118
      %p120 = scmp.ne.s32.totalorder %s106, %s107
      %p121 = scmp.eq.s32.totalorder %s20, 1
      %p122 = por %p120, %p121
      %p124 = scmp.ne.s32.totalorder %s107, %s123
      %p125 = scmp.eq.s32.totalorder %s20, 0
      %p126 = por %p124, %p125
      %p127 = scmp.le.s32.totalorder 1, %s14
      %p128 = scmp.lt.s32.totalorder %s14, 3
      %p129 = pnand %p127, %p128
      %p130 = pneg %p129
      // Predicated region
      $region9: #{tpu_custom_call.1} parent=5 // pred_check
        _
      $region10: #{tpu_custom_call.1} parent=5 // pred_check_branch
        %132 = sbr.rel (%p129) target = $region12
      $region11: #{tpu_custom_call.1} parent=5 // pred_region
        %s133 = ssub.s32 %s14, 1
        // Predicated region
        $region13: #{tpu_custom_call.1} parent=11 // pred_check
          %p134 = pneg %p89
        $region14: #{tpu_custom_call.1} parent=11 // pred_check_branch
          %136 = sbr.rel (%p134) target = $region16
        $region15: #{tpu_custom_call.1} parent=11 // pred_region
          %p137 = scmp.lt.s32.totalorder %s25, 0
          %s138 = scalar_select %p137, %s25, 0
          %s139 = smul.addr %s138, 4
          %s140 = scalar_lea.vmem %s1, %s139
        $region16: #{tpu_custom_call.1} parent=11 // pred_fallthru
          _
      $region12: #{tpu_custom_call.1} parent=5 // pred_fallthru
        _
      %p141 = scmp.lt.s32.totalorder %s14, 2
      // Predicated region
      $region17: #{tpu_custom_call.1} parent=5 // pred_check
        %p142 = pneg %p141
      $region18: #{tpu_custom_call.1} parent=5 // pred_check_branch
        %144 = sbr.rel (%p142) target = $region20
      $region19: #{tpu_custom_call.1} parent=5 // pred_region
        // Predicated region
        $region21: #{tpu_custom_call.1} parent=19 // pred_check
          %p145 = pneg %p57
        $region22: #{tpu_custom_call.1} parent=19 // pred_check_branch
          %147 = sbr.rel (%p145) target = $region24
        $region23: #{tpu_custom_call.1} parent=19 // pred_region
          %s148 = sand.u32 %s47, 1
          %s149 = scalar_lea.sflag [#allocation3], %s148
          %s150 = sand.u32 %s47, 1
          %s151 = smul.addr %s150, 8
          %s152 = scalar_lea.vmem [#allocation2], %s151
          %s153 = smul.u32 2, %s23
          %s155 = ssub.s32 128, 128
          %156 = vsyncadd %s149, %s155
          %s157 = smul.addr %s22, 2
          %s158 = sadd.s32 %s153, %s157
          %s159 = smul.addr %s21, 2
          %s160 = sadd.s32 %s158, %s159
          %s161 = smul.addr %s160, 64
          %s162 = scalar_lea.hbm %s0, %s161
          %s164 = sshll.u32 %s152, 4
          %s165 = int_to_ptr.vmem [resolvable:$true] %s164
          %167 = dma.hbm_to_vmem [thread:$0]  %s162, 128, %s165, %s149
        $region24: #{tpu_custom_call.1} parent=19 // pred_fallthru
          _
      $region20: #{tpu_custom_call.1} parent=5 // pred_fallthru
        _
      %p168 = scmp.le.s32.totalorder 1, %s14
      %p169 = scmp.lt.s32.totalorder %s14, 3
      %p170 = pnand %p168, %p169
      %p171 = pneg %p170
      // Predicated region
      $region25: #{tpu_custom_call.1} parent=5 // pred_check
        _
      $region26: #{tpu_custom_call.1} parent=5 // pred_check_branch
        %173 = sbr.rel (%p170) target = $region28
      $region27: #{tpu_custom_call.1} parent=5 // pred_region
        %s174 = ssub.s32 %s14, 1
        %s175 = sand.u32 %s50, 1
        %s176 = scalar_lea.sflag [#allocation3], %s175
        %s177 = sand.u32 %s50, 1
        %s178 = smul.addr %s177, 8
        %s179 = scalar_lea.vmem [#allocation2], %s178
        // Predicated region
        $region29: #{tpu_custom_call.1} parent=27 // pred_check
          %p180 = pneg %p63
        $region30: #{tpu_custom_call.1} parent=27 // pred_check_branch
          %182 = sbr.rel (%p180) target = $region32
        $region31: #{tpu_custom_call.1} parent=27 // pred_region
          %183 = dma.done %s176, 128
        $region32: #{tpu_custom_call.1} parent=27 // pred_fallthru
          _
        %s184 = sand.u32 %s50, 1
        %s185 = scalar_lea.sflag [#allocation3], %s184
        %s186 = sand.u32 %s50, 1
        %s187 = smul.addr %s186, 8
        %s188 = scalar_lea.vmem [#allocation2], %s187
        %p189 = pneg %p63
        %p190 = pneg %p60
        %p191 = scmp.lt.s32.totalorder %s25, 0
        %s192 = scalar_select %p191, %s25, 0
        %s193 = smul.addr %s192, 4
        %s194 = scalar_lea.vmem %s1, %s193
        %p195 = pneg %p89
        %p196 = pneg %p86
        %p197 = pneg %p119
        %p198 = pneg %p116
        %s199 = sand.u32 %s106, 1
        %s200 = scalar_lea.sflag [#allocation4], %s199
        %s201 = sand.u32 %s106, 1
        %s202 = smul.addr %s201, 8
        %s203 = scalar_lea.vmem [#allocation5], %s202
        %s204 = smul.u32 2, %s26
        %p205 = scmp.lt.s32.totalorder %s25, 0
        %s206 = scalar_select %p205, %s25, 0
        %s207 = smul.addr %s206, 4
        %s208 = scalar_lea.vmem %s1, %s207
        %s209 = smul.u32 2, %s26
        %v210 = vld [vmem:[%s179] sm:$0xff]
        %v211 = vld [vmem:[%s208] sm:$0xf]
        %213 = vset.pattern.permute.xlu0 0
        %214 = vperm.xlu0 %213, %v211
        %v215 = vpop.permute.xlu0 %214
        %v217 = vunpack.c.l.s4 839922192
        %v218 = vunpack.c.0.s8 %v217
        %v219 = vlaneseq
        %v220 = vshrl.u32 %v219, 7
        %v221 = vsub.s32 %v218, %v220
        %v222 = vrot.slane %v215, %v221
        %v224 = vmul.f32 %v210, %v222
        %225 = vst [vmem:[%s203] sm:$0xff] %v224
        %s226 = sand.u32 %s106, 1
        %s227 = scalar_lea.sflag [#allocation4], %s226
        %s228 = sand.u32 %s106, 1
        %s229 = smul.addr %s228, 8
        %s230 = scalar_lea.vmem [#allocation5], %s229
        // Predicated region
        $region33: #{tpu_custom_call.1} parent=27 // pred_check
          %p231 = pneg %p116
        $region34: #{tpu_custom_call.1} parent=27 // pred_check_branch
          %233 = sbr.rel (%p231) target = $region36
        $region35: #{tpu_custom_call.1} parent=27 // pred_region
          %s234 = smul.u32 2, %s26
          %s236 = ssub.s32 128, 128
          %237 = vsyncadd %s227, %s236
          %s238 = smul.addr %s25, 2
          %s239 = sadd.s32 %s234, %s238
          %s240 = smul.addr %s24, 2
          %s241 = sadd.s32 %s239, %s240
          %s242 = smul.addr %s241, 64
          %s243 = scalar_lea.hbm %s2, %s242
          %s245 = sshll.u32 %s230, 4
          %s246 = int_to_ptr.vmem [resolvable:$true] %s245
          %248 = dma.vmem_to_hbm [thread:$0]  %s246, 128, %s243, %s227
        $region36: #{tpu_custom_call.1} parent=27 // pred_fallthru
          _
      $region28: #{tpu_custom_call.1} parent=5 // pred_fallthru
        _
      %p249 = scmp.le.s32.totalorder 2, %s14
      // Predicated region
      $region37: #{tpu_custom_call.1} parent=5 // pred_check
        %p250 = pneg %p249
      $region38: #{tpu_custom_call.1} parent=5 // pred_check_branch
        %252 = sbr.rel (%p250) target = $region40
      $region39: #{tpu_custom_call.1} parent=5 // pred_region
        %s253 = ssub.s32 %s14, 2
        // Predicated region
        $region41: #{tpu_custom_call.1} parent=39 // pred_check
          %p254 = pneg %p122
        $region42: #{tpu_custom_call.1} parent=39 // pred_check_branch
          %256 = sbr.rel (%p254) target = $region44
        $region43: #{tpu_custom_call.1} parent=39 // pred_region
          %s257 = sand.u32 %s107, 1
          %s258 = scalar_lea.sflag [#allocation4], %s257
          %s259 = sand.u32 %s107, 1
          %s260 = smul.addr %s259, 8
          %s261 = scalar_lea.vmem [#allocation5], %s260
          %262 = dma.done %s258, 128
        $region44: #{tpu_custom_call.1} parent=39 // pred_fallthru
          _
      $region40: #{tpu_custom_call.1} parent=5 // pred_fallthru
        _
    $region6: #{tpu_custom_call.1} parent=1 // loop_footer
      %s18 = sadd.s32 1, %s14
    $region7: #{tpu_custom_call.1} parent=1 // loop_footer_branch
      %13 = sbr.rel target = $region3
    $region8: #{tpu_custom_call.1} parent=1 // loop_exit
      _
    %263 = vsyncpa [#allocation3], 1
    %s264 = scalar_lea.sflag [#allocation3], 1
    %265 = vsyncpa %s264, 1
    %266 = vsyncpa [#allocation4], 1
    %s267 = scalar_lea.sflag [#allocation4], 1
    %268 = vsyncpa %s267, 1

</llo_original>
